<compile_context>
chip_gen: v6e
topology: v6e:2x2x1
jax: 0.10.0
libtpu: 0.0.40
codegen_flags: <defaults>
</compile_context>

<pallas_src>
import functools

import jax
import jax.numpy as jnp
from jax.experimental import pallas as pl
from jax.experimental.pallas import tpu as pltpu

_NEG_INF = -1.0e30  # padded class logits -> exp() underflows to exactly 0 in the LSE


def _round_up(x, m):
    return (x + m - 1) // m * m


def _vmem_cap_bytes():
    try:
        return int(pltpu.get_tpu_info().vmem_capacity_bytes)
    except Exception:
        return 128 * 2 ** 20  # v5e/v6e physical VMEM fallback


# ----------------------------------------------------------------------------
# Pallas kernel: one batch tile x N noise draws -> per-draw partial CE losses
# ----------------------------------------------------------------------------
def _mnn_loss_kernel(labels_ref, x_ref, w1t_ref, b1_ref, w2t_ref, b2_ref,
                     out_ref, *, n_draws, inv_batch):
    x = x_ref[...].astype(jnp.bfloat16)              # (TB, Din) bf16 MXU operand
    labels = labels_ref[...]                          # (TB, 1) int32, -1 == padded row
    valid = (labels >= 0).astype(jnp.float32)         # mask padded batch rows

    tb = x.shape[0]
    cp = w2t_ref.shape[-1]
    npad = out_ref.shape[-1]

    # hoisted out of the draws loop (depend only on labels / shapes)
    cls_iota = jax.lax.broadcasted_iota(jnp.int32, (tb, cp), 1)
    onehot = cls_iota == labels                       # (TB, Cp) bool
    lane_iota = jax.lax.broadcasted_iota(jnp.int32, (1, npad), 1)

    row = jnp.zeros((1, npad), jnp.float32)
    # static unroll over noise draws: each draw reuses the resident x tile.
    # TODO(synk): for very large n_draws switch to lax.fori_loop / a grid axis.
    for n in range(n_draws):
        w1t = w1t_ref[n]                              # (Din, Hp) bf16, pre-transposed
        b1 = b1_ref[n]                                # (1, Hp)   f32
        w2t = w2t_ref[n]                              # (Hp, Cp)  bf16, pre-transposed
        b2 = b2_ref[n]                                # (1, Cp)   f32 (padded cols -1e30)

        # fc1 -> ReLU (f32 epilogue, bf16 only at the MXU boundary)
        h = jnp.dot(x, w1t, preferred_element_type=jnp.float32)
        h = jnp.maximum(h + b1, 0.0).astype(jnp.bfloat16)

        # fc2 -> logits (f32)
        logits = jnp.dot(h, w2t, preferred_element_type=jnp.float32) + b2

        # numerically stable cross entropy; padded classes contribute exp()==0
        m = jnp.max(logits, axis=-1, keepdims=True)
        lse = m + jnp.log(jnp.sum(jnp.exp(logits - m), axis=-1, keepdims=True))
        true_logit = jnp.sum(jnp.where(onehot, logits, 0.0), axis=-1, keepdims=True)

        partial = jnp.sum((lse - true_logit) * valid) * inv_batch  # scalar, already /B
        row = row + jnp.where(lane_iota == n, partial, 0.0)

    # lane-dense per-tile output slab; identical across the 8 sublanes
    out_ref[...] = jnp.broadcast_to(row, out_ref.shape)


# ----------------------------------------------------------------------------
# vector_to_parameters equivalent over a stack of N flat parameter vectors
# (PyTorch parameter order, native (out, in) layout before transpose)
# ----------------------------------------------------------------------------
def _split_params_stacked(vec, hidden, d_in, num_classes):
    N = vec.shape[0]
    H, Din, C = hidden, d_in, num_classes
    o = 0
    w1 = vec[:, o:o + H * Din].reshape(N, H, Din); o += H * Din
    b1 = vec[:, o:o + H].reshape(N, 1, H);         o += H
    w2 = vec[:, o:o + C * H].reshape(N, C, H);     o += C * H
    b2 = vec[:, o:o + C].reshape(N, 1, C);         o += C
    return w1, b1, w2, b2


# ----------------------------------------------------------------------------
# Wrapper: weight prep, padding, BlockSpecs, pallas_call
# ----------------------------------------------------------------------------
@functools.partial(jax.jit, static_argnames=("d_in", "hidden", "num_classes"))
def _mnn_loss_forward(images, labels, mean_post, noise_stack, *,
                      d_in, hidden, num_classes):
    B = images.shape[0]
    N = noise_stack.shape[0]
    Din, H, C = d_in, hidden, num_classes

    # NCHW row-major flatten (torch.flatten); keep the caller's dtype so bf16
    # images stream half the HBM bytes (cast to bf16 happens inside the kernel).
    x = images.reshape(B, -1)
    assert x.shape[1] == Din

    # lane-dense paddings
    Hp = _round_up(H, 128)
    Cp = _round_up(C, 128)
    Npad = _round_up(max(N, 1), 128)

    # large batch tile (multiple of 16 for bf16 sublane packing)
    TB = 512 if B >= 512 else _round_up(B, 16)
    Bp = _round_up(B, TB)
    ntiles = Bp // TB

    x_pad = jnp.pad(x, ((0, Bp - B), (0, 0)))
    labels_pad = jnp.pad(labels.astype(jnp.int32).reshape(B, 1),
                         ((0, Bp - B), (0, 0)), constant_values=-1)

    # vector_to_parameters equivalent, done ONCE per call over the tiny param
    # vector (never per batch tile): add noise, transpose to (in, out), pad
    # H/C to lane multiples, pack MXU operands to bf16 (biases stay f32).
    vec = mean_post.astype(jnp.float32)[None, :] + noise_stack.astype(jnp.float32)
    w1, b1, w2, b2 = _split_params_stacked(vec, H, Din, C)
    w1t = jnp.pad(jnp.transpose(w1, (0, 2, 1)),
                  ((0, 0), (0, 0), (0, Hp - H))).astype(jnp.bfloat16)      # (N, Din, Hp)
    b1p = jnp.pad(b1, ((0, 0), (0, 0), (0, Hp - H)))                        # (N, 1, Hp) f32
    w2t = jnp.pad(jnp.transpose(w2, (0, 2, 1)),
                  ((0, 0), (0, Hp - H), (0, Cp - C))).astype(jnp.bfloat16)  # (N, Hp, Cp)
    b2p = jnp.pad(b2, ((0, 0), (0, 0), (0, Cp - C)),
                  constant_values=_NEG_INF)                                 # (N, 1, Cp) f32

    kernel = functools.partial(_mnn_loss_kernel, n_draws=N, inv_batch=1.0 / B)

    tile = lambda i: (i, 0)        # per-batch-tile inputs
    const3 = lambda i: (0, 0, 0)   # weights: fetched once, reused across tiles

    # VMEM budget (double-buffered inputs) with generation-aware cap
    x_itemsize = x_pad.dtype.itemsize
    w_bytes = N * (Din * Hp * 2 + Hp * 4 + Hp * Cp * 2 + Cp * 4)
    vmem_need = (2 * TB * Din * x_itemsize     # x tiles (double buffer)
                 + 2 * TB * 4                  # labels
                 + 2 * w_bytes                 # const weights (still double-buffered)
                 + 2 * 8 * Npad * 4            # output slab
                 + TB * (Hp + Cp) * 8)         # f32 intermediates + slack
    cap = _vmem_cap_bytes()
    vmem_limit = int(max(16 * 2 ** 20,
                         min(int(0.75 * cap), max(32 * 2 ** 20, 2 * vmem_need))))

    cost = pl.CostEstimate(
        flops=int(2 * N * Bp * (Din * Hp + Hp * Cp)),
        transcendentals=int(N * Bp * (Cp + 1)),
        bytes_accessed=int(Bp * Din * x_itemsize + w_bytes + 4 * Bp
                           + 4 * ntiles * 8 * Npad),
    )

    # Batch tiles are independent (per-tile partial outputs), so the grid axis
    # is "parallel": shards across both TensorCores on v7x, neutral elsewhere.
    out = pl.pallas_call(
        kernel,
        out_shape=jax.ShapeDtypeStruct((ntiles, 8, Npad), jnp.float32),
        grid=(ntiles,),
        in_specs=[
            pl.BlockSpec((TB, 1), tile),         # labels
            pl.BlockSpec((TB, Din), tile),       # x
            pl.BlockSpec((N, Din, Hp), const3),  # W1^T (mean+noise, bf16)
            pl.BlockSpec((N, 1, Hp), const3),    # b1   (f32)
            pl.BlockSpec((N, Hp, Cp), const3),   # W2^T (mean+noise, bf16, class-padded)
            pl.BlockSpec((N, 1, Cp), const3),    # b2   (f32, padded cols = -1e30)
        ],
        out_specs=pl.BlockSpec((1, 8, Npad), lambda i: (i, 0, 0)),
        compiler_params=pltpu.CompilerParams(
            dimension_semantics=("parallel",),
            vmem_limit_bytes=vmem_limit,
        ),
        cost_estimate=cost,
    )(labels_pad, x_pad, w1t, b1p, w2t, b2p)

    # sublane 0 of every tile holds the per-draw partials; sum over tiles
    return jnp.sum(out[:, 0, :N], axis=0)        # (N,) per-draw mean CE loss


# ----------------------------------------------------------------------------
# mnnLoss equivalent
# ----------------------------------------------------------------------------
class MnnLossPallas:
    """JAX/Pallas port of mnnLoss.forward for a fixed 2-layer-MLP `model` and
    CrossEntropyLoss `criterion`.  `forward` matches the single-noise PyTorch
    API; `forward_multi` evaluates N noise draws while streaming the images
    from HBM only once (the main algorithmic win for MNN-style evaluation)."""

    def __init__(self, mean_post, sigma_post_, d_in, hidden, num_classes):
        self.mean_post = jnp.asarray(mean_post, jnp.float32)
        self.sigma_post_ = sigma_post_      # unused in forward (same as PyTorch)
        self.d_in = d_in
        self.hidden = hidden
        self.num_classes = num_classes
        self.d_size = hidden * d_in + hidden + num_classes * hidden + num_classes
        assert self.mean_post.shape == (self.d_size,)
        self.noise = None

    def forward(self, images, labels, noise):
        self.noise = noise
        # NOTE: out-of-range labels silently contribute `lse` (torch CE would error).
        return _mnn_loss_forward(images, labels, self.mean_post,
                                 jnp.asarray(noise)[None, :],
                                 d_in=self.d_in, hidden=self.hidden,
                                 num_classes=self.num_classes)[0]

    def forward_multi(self, images, labels, noise_stack):
        return _mnn_loss_forward(images, labels, self.mean_post,
                                 jnp.asarray(noise_stack),
                                 d_in=self.d_in, hidden=self.hidden,
                                 num_classes=self.num_classes)

    __call__ = forward


# ----------------------------------------------------------------------------
# main
# ----------------------------------------------------------------------------
if __name__ == "__main__":
    B, C_in, Hs, Ws = 2, 4, 16, 16
    HIDDEN, NUM_CLASSES = 32, 10
    D_IN = C_in * Hs * Ws
    D_SIZE = HIDDEN * D_IN + HIDDEN + NUM_CLASSES * HIDDEN + NUM_CLASSES

    key = jax.random.PRNGKey(0)
    k_img, k_lab, k_mean, k_sig, k_noise, k_multi = jax.random.split(key, 6)

    images = jax.random.normal(k_img, (B, C_in, Hs, Ws), dtype=jnp.float32)
    images_bf16 = images.astype(jnp.bfloat16)   # staged once; kernel streams bf16
    labels = jax.random.randint(k_lab, (B,), 0, NUM_CLASSES, dtype=jnp.int32)

    # deterministic synthetic "checkpoint": flat mean / sigma parameter vectors
    mean_post = 0.05 * jax.random.normal(k_mean, (D_SIZE,), dtype=jnp.float32)
    sigma_post_ = 0.01 * jnp.abs(jax.random.normal(k_sig, (D_SIZE,), dtype=jnp.float32))
    noise = 0.01 * jax.random.normal(k_noise, (D_SIZE,), dtype=jnp.float32)

    loss_mod = MnnLossPallas(mean_post, sigma_post_, D_IN, HIDDEN, NUM_CLASSES)
    loss = jax.block_until_ready(loss_mod(images_bf16, labels, noise))

    # pure-JAX reference with identical precision choices (bf16 x, bf16 MXU
    # operands, f32 accumulation), native (out,in) layout.
    dn = (((1,), (1,)), ((), ()))
    xb = images_bf16.reshape(B, -1)

    def split_flat(vec_flat):
        H, Din, C = HIDDEN, D_IN, NUM_CLASSES
        o = 0
        w1 = vec_flat[o:o + H * Din].reshape(H, Din); o += H * Din
        b1 = vec_flat[o:o + H].reshape(1, H);         o += H
        w2 = vec_flat[o:o + C * H].reshape(C, H);     o += C * H
        b2 = vec_flat[o:o + C].reshape(1, C)
        return w1, b1, w2, b2

    def ref_loss_bf16(vec_flat):
        w1, b1, w2, b2 = split_flat(vec_flat)
        h = jax.lax.dot_general(xb, w1.astype(jnp.bfloat16), dn,
                                preferred_element_type=jnp.float32)
        h = jnp.maximum(h + b1, 0.0)
        logits = jax.lax.dot_general(h.astype(jnp.bfloat16), w2.astype(jnp.bfloat16),
                                     dn, preferred_element_type=jnp.float32) + b2
        return jnp.mean(
            jax.nn.logsumexp(logits, axis=-1)
            - jnp.take_along_axis(logits, labels[:, None], axis=-1)[:, 0])

    ref = ref_loss_bf16(mean_post + noise)
    assert jnp.allclose(loss, ref, rtol=2e-3, atol=2e-3), (loss, ref)

    # loose sanity check against a full-f32 forward
    def ref_loss_f32(vec_flat):
        w1, b1, w2, b2 = split_flat(vec_flat)
        xf = images.reshape(B, -1)
        h = jnp.maximum(xf @ w1.T + b1, 0.0)
        logits = h @ w2.T + b2
        return jnp.mean(
            jax.nn.logsumexp(logits, axis=-1)
            - jnp.take_along_axis(logits, labels[:, None], axis=-1)[:, 0])

    ref32 = ref_loss_f32(mean_post + noise)
    assert jnp.allclose(loss, ref32, rtol=5e-2, atol=5e-2), (loss, ref32)

    # multi-draw path: 4 noise draws share a single streaming pass over x
    noises = 0.01 * jax.random.normal(k_multi, (4, D_SIZE), dtype=jnp.float32)
    losses = jax.block_until_ready(loss_mod.forward_multi(images_bf16, labels, noises))
    refs = jnp.stack([ref_loss_bf16(mean_post + noises[n]) for n in range(4)])
    assert losses.shape == (4,)
    assert jnp.allclose(losses, refs, rtol=2e-3, atol=2e-3), (losses, refs)

    print("KERNEL_OK")
</pallas_src>

<mosaic_0001>
module attributes {stable_mosaic.version = 11 : i64} {
  func.func @_mnn_loss_kernel(%arg0: i32, %arg1: memref<16x1xi32, #tpu.memory_space<vmem>>, %arg2: memref<16x1024xbf16, #tpu.memory_space<vmem>>, %arg3: memref<1x1024x128xbf16, #tpu.memory_space<vmem>>, %arg4: memref<1x1x128xf32, #tpu.memory_space<vmem>>, %arg5: memref<1x128x128xbf16, #tpu.memory_space<vmem>>, %arg6: memref<1x1x128xf32, #tpu.memory_space<vmem>>, %arg7: memref<1x8x128xf32, #tpu.memory_space<vmem>>) attributes {dimension_semantics = [#tpu.dimension_semantics<parallel>], iteration_bounds = array<i64: 1>, scalar_prefetch = 0 : i64, scratch_operands = 0 : i64, tpu.core_type = #tpu.core_type<tc>, window_params = [{transform_indices = @transform_0, window_bounds = array<i64: 16, 1>}, {transform_indices = @transform_1, window_bounds = array<i64: 16, 1024>}, {pipeline_mode = #tpu.pipeline_mode<synchronous>, transform_indices = @transform_2, window_bounds = array<i64: 1, 1024, 128>}, {pipeline_mode = #tpu.pipeline_mode<synchronous>, transform_indices = @transform_3, window_bounds = array<i64: 1, 1, 128>}, {pipeline_mode = #tpu.pipeline_mode<synchronous>, transform_indices = @transform_4, window_bounds = array<i64: 1, 128, 128>}, {pipeline_mode = #tpu.pipeline_mode<synchronous>, transform_indices = @transform_5, window_bounds = array<i64: 1, 1, 128>}, {transform_indices = @transform_6, window_bounds = array<i64: 1, 8, 128>}]} {
    %c0 = arith.constant 0 : index
    %c0_0 = arith.constant 0 : index
    %0 = vector.load %arg2[%c0, %c0_0] : memref<16x1024xbf16, #tpu.memory_space<vmem>>, vector<16x1024xbf16>
    %c0_1 = arith.constant 0 : index
    %c0_2 = arith.constant 0 : index
    %1 = vector.load %arg1[%c0_1, %c0_2] : memref<16x1xi32, #tpu.memory_space<vmem>>, vector<16x1xi32>
    %c0_i32 = arith.constant 0 : i32
    %2 = vector.broadcast %c0_i32 : i32 to vector<16x1xi32>
    %3 = arith.cmpi sge, %1, %2 : vector<16x1xi32>
    %4 = arith.extui %3 : vector<16x1xi1> to vector<16x1xi32>
    %5 = arith.sitofp %4 : vector<16x1xi32> to vector<16x1xf32>
    %6 = tpu.iota {dimensions = array<i32: 1>} : vector<16x128xi32>
    %7 = vector.broadcast %1 : vector<16x1xi32> to vector<16x128xi32>
    %8 = arith.cmpi eq, %6, %7 : vector<16x128xi32>
    %9 = tpu.iota {dimensions = array<i32: 1>} : vector<1x128xi32>
    %cst = arith.constant 0.000000e+00 : f32
    %10 = vector.broadcast %cst : f32 to vector<1x128xf32>
    %c0_3 = arith.constant 0 : index
    %c0_4 = arith.constant 0 : index
    %c0_5 = arith.constant 0 : index
    %11 = vector.load %arg3[%c0_3, %c0_4, %c0_5] : memref<1x1024x128xbf16, #tpu.memory_space<vmem>>, vector<1x1024x128xbf16>
    %12 = vector.shape_cast %11 : vector<1x1024x128xbf16> to vector<1024x128xbf16>
    %c0_6 = arith.constant 0 : index
    %c0_7 = arith.constant 0 : index
    %c0_8 = arith.constant 0 : index
    %13 = vector.load %arg4[%c0_6, %c0_7, %c0_8] : memref<1x1x128xf32, #tpu.memory_space<vmem>>, vector<1x1x128xf32>
    %14 = vector.shape_cast %13 : vector<1x1x128xf32> to vector<1x128xf32>
    %c0_9 = arith.constant 0 : index
    %c0_10 = arith.constant 0 : index
    %c0_11 = arith.constant 0 : index
    %15 = vector.load %arg5[%c0_9, %c0_10, %c0_11] : memref<1x128x128xbf16, #tpu.memory_space<vmem>>, vector<1x128x128xbf16>
    %16 = vector.shape_cast %15 : vector<1x128x128xbf16> to vector<128x128xbf16>
    %c0_12 = arith.constant 0 : index
    %c0_13 = arith.constant 0 : index
    %c0_14 = arith.constant 0 : index
    %17 = vector.load %arg6[%c0_12, %c0_13, %c0_14] : memref<1x1x128xf32, #tpu.memory_space<vmem>>, vector<1x1x128xf32>
    %18 = vector.shape_cast %17 : vector<1x1x128xf32> to vector<1x128xf32>
    %cst_15 = arith.constant dense<0.000000e+00> : vector<16x128xf32>
    %19 = tpu.matmul %0, %12, %cst_15 {dimension_numbers = #tpu.dot_dimension_numbers<[1], [0], [0], [1], [0, 0, 1, 1], [], []>} : vector<16x1024xbf16>, vector<1024x128xbf16>, vector<16x128xf32> -> vector<16x128xf32>
    %20 = vector.broadcast %14 : vector<1x128xf32> to vector<16x128xf32>
    %21 = arith.addf %19, %20 : vector<16x128xf32>
    %cst_16 = arith.constant 0.000000e+00 : f32
    %22 = vector.broadcast %cst_16 : f32 to vector<16x128xf32>
    %23 = arith.maximumf %21, %22 : vector<16x128xf32>
    %24 = arith.truncf %23 : vector<16x128xf32> to vector<16x128xbf16>
    %cst_17 = arith.constant dense<0.000000e+00> : vector<16x128xf32>
    %25 = tpu.matmul %24, %16, %cst_17 {dimension_numbers = #tpu.dot_dimension_numbers<[1], [0], [0], [1], [0, 0, 1, 1], [], []>} : vector<16x128xbf16>, vector<128x128xbf16>, vector<16x128xf32> -> vector<16x128xf32>
    %26 = vector.broadcast %18 : vector<1x128xf32> to vector<16x128xf32>
    %27 = arith.addf %25, %26 : vector<16x128xf32>
    %cst_18 = arith.constant dense<0xFF800000> : vector<16xf32>
    %28 = vector.multi_reduction <maximumf>, %27, %cst_18 [1] : vector<16x128xf32> to vector<16xf32>
    %29 = vector.shape_cast %28 : vector<16xf32> to vector<16x1xf32>
    %30 = vector.broadcast %29 : vector<16x1xf32> to vector<16x128xf32>
    %31 = arith.subf %27, %30 : vector<16x128xf32>
    %32 = math.exp %31 : vector<16x128xf32>
    %cst_19 = arith.constant dense<0.000000e+00> : vector<16xf32>
    %33 = vector.multi_reduction <add>, %32, %cst_19 [1] : vector<16x128xf32> to vector<16xf32>
    %34 = vector.shape_cast %33 : vector<16xf32> to vector<16x1xf32>
    %35 = math.log %34 : vector<16x1xf32>
    %36 = arith.addf %29, %35 : vector<16x1xf32>
    %cst_20 = arith.constant 0.000000e+00 : f32
    %37 = vector.broadcast %cst_20 : f32 to vector<16x128xf32>
    %38 = arith.select %8, %27, %37 : vector<16x128xi1>, vector<16x128xf32>
    %cst_21 = arith.constant dense<0.000000e+00> : vector<16xf32>
    %39 = vector.multi_reduction <add>, %38, %cst_21 [1] : vector<16x128xf32> to vector<16xf32>
    %40 = vector.shape_cast %39 : vector<16xf32> to vector<16x1xf32>
    %41 = arith.subf %36, %40 : vector<16x1xf32>
    %42 = arith.mulf %41, %5 : vector<16x1xf32>
    %43 = vector.shape_cast %42 : vector<16x1xf32> to vector<1x16x1xf32>
    %cst_22 = arith.constant dense<0.000000e+00> : vector<1xf32>
    %44 = vector.multi_reduction <add>, %43, %cst_22 [1, 2] : vector<1x16x1xf32> to vector<1xf32>
    %45 = vector.shape_cast %44 : vector<1xf32> to vector<1x1x1xf32>
    %46 = vector.extract %45[0, 0, 0] : f32 from vector<1x1x1xf32>
    %cst_23 = arith.constant 5.000000e-01 : f32
    %47 = arith.mulf %46, %cst_23 : f32
    %c0_i32_24 = arith.constant 0 : i32
    %48 = vector.broadcast %c0_i32_24 : i32 to vector<1x128xi32>
    %49 = arith.cmpi eq, %9, %48 : vector<1x128xi32>
    %cst_25 = arith.constant 0.000000e+00 : f32
    %50 = vector.broadcast %47 : f32 to vector<1x128xf32>
    %51 = vector.broadcast %cst_25 : f32 to vector<1x128xf32>
    %52 = arith.select %49, %50, %51 : vector<1x128xi1>, vector<1x128xf32>
    %53 = arith.addf %10, %52 : vector<1x128xf32>
    %54 = vector.shape_cast %53 : vector<1x128xf32> to vector<1x1x128xf32>
    %55 = vector.broadcast %54 : vector<1x1x128xf32> to vector<1x8x128xf32>
    %c0_26 = arith.constant 0 : index
    %c0_27 = arith.constant 0 : index
    %c0_28 = arith.constant 0 : index
    %56 = vector.load %arg7[%c0_26, %c0_27, %c0_28] : memref<1x8x128xf32, #tpu.memory_space<vmem>>, vector<1x8x128xf32>
    tpu.vector_store %arg7[%c0_26, %c0_27, %c0_28], %55 {strides = array<i32>} : memref<1x8x128xf32, #tpu.memory_space<vmem>>, vector<1x8x128xf32>,
    return
  }
  func.func @transform_0(%arg0: i32) -> (i32, i32) {
    %c0_i32 = arith.constant 0 : i32
    %c0_i32_0 = arith.constant 0 : i32
    return %arg0, %c0_i32 : i32, i32
  }
  func.func @transform_1(%arg0: i32) -> (i32, i32) {
    %c0_i32 = arith.constant 0 : i32
    %c0_i32_0 = arith.constant 0 : i32
    return %arg0, %c0_i32 : i32, i32
  }
  func.func @transform_2(%arg0: i32) -> (i32, i32, i32) {
    %c0_i32 = arith.constant 0 : i32
    %c0_i32_0 = arith.constant 0 : i32
    %c0_i32_1 = arith.constant 0 : i32
    %c0_i32_2 = arith.constant 0 : i32
    return %c0_i32, %c0_i32_0, %c0_i32_1 : i32, i32, i32
  }
  func.func @transform_3(%arg0: i32) -> (i32, i32, i32) {
    %c0_i32 = arith.constant 0 : i32
    %c0_i32_0 = arith.constant 0 : i32
    %c0_i32_1 = arith.constant 0 : i32
    %c0_i32_2 = arith.constant 0 : i32
    return %c0_i32, %c0_i32_0, %c0_i32_1 : i32, i32, i32
  }
  func.func @transform_4(%arg0: i32) -> (i32, i32, i32) {
    %c0_i32 = arith.constant 0 : i32
    %c0_i32_0 = arith.constant 0 : i32
    %c0_i32_1 = arith.constant 0 : i32
    %c0_i32_2 = arith.constant 0 : i32
    return %c0_i32, %c0_i32_0, %c0_i32_1 : i32, i32, i32
  }
  func.func @transform_5(%arg0: i32) -> (i32, i32, i32) {
    %c0_i32 = arith.constant 0 : i32
    %c0_i32_0 = arith.constant 0 : i32
    %c0_i32_1 = arith.constant 0 : i32
    %c0_i32_2 = arith.constant 0 : i32
    return %c0_i32, %c0_i32_0, %c0_i32_1 : i32, i32, i32
  }
  func.func @transform_6(%arg0: i32) -> (i32, i32, i32) {
    %c0_i32 = arith.constant 0 : i32
    %c0_i32_0 = arith.constant 0 : i32
    %c0_i32_1 = arith.constant 0 : i32
    return %arg0, %c0_i32, %c0_i32_0 : i32, i32, i32
  }
}

</mosaic_0001>

<llo_original>
// kernel: _mnn_loss_forward.1
$region0: #{_mnn_loss_forward.1}
  #allocation0 [shape = 'u32[]', space=smem, size = 0x4, offset = 0x4, fixed_abs, tag = 'smem constant byte address 0x4 - core index']
  #allocation1 [shape = 'u32[144,128]{1,0:T(1,128)}', space=vmem, size = 0x12000, scoped, tag = 'internal scratch']
  %s0 = inlined_call_operand.vmem [shape: s32[16,1], index: 0, kind: input, shape index: {}]
  %s1 = inlined_call_operand.vmem [shape: bf16[16,1024], index: 1, kind: input, shape index: {}]
  %s2 = inlined_call_operand.vmem [shape: bf16[1,1024,128], index: 2, kind: input, shape index: {}]
  %s3 = inlined_call_operand.vmem [shape: f32[1,1,128], index: 3, kind: input, shape index: {}]
  %s4 = inlined_call_operand.vmem [shape: bf16[1,128,128], index: 4, kind: input, shape index: {}]
  %s5 = inlined_call_operand.vmem [shape: f32[1,1,128], index: 5, kind: input, shape index: {}]
  %s6 = inlined_call_operand.vmem [shape: f32[1,8,128], index: 6, kind: output, shape index: {}]
  %s7 = sld [smem:[#allocation0]]
  $region34: #{_mnn_loss_forward.1} parent=0
    _
  %s9 = ssub.s32 1, %s7
  %s10 = scalar_select 0, %s9, %s7
  // Predicated region
  $region2: #{_mnn_loss_forward.1} parent=0 // pred_check
    _
  $region3: #{_mnn_loss_forward.1} parent=0 // pred_check_branch
    %12 = sbr.rel (0) target = $region5
  $region4: #{_mnn_loss_forward.1} parent=0 // pred_region
    _
  $region5: #{_mnn_loss_forward.1} parent=0 // pred_fallthru
    _
  // Predicated region
  $region6: #{_mnn_loss_forward.1} parent=0 // pred_check
    _
  $region7: #{_mnn_loss_forward.1} parent=0 // pred_check_branch
    %14 = sbr.rel (0) target = $region9
  $region8: #{_mnn_loss_forward.1} parent=0 // pred_region
    _
  $region9: #{_mnn_loss_forward.1} parent=0 // pred_fallthru
    _
  // Predicated region
  $region10: #{_mnn_loss_forward.1} parent=0 // pred_check
    _
  $region11: #{_mnn_loss_forward.1} parent=0 // pred_check_branch
    %16 = sbr.rel (0) target = $region13
  $region12: #{_mnn_loss_forward.1} parent=0 // pred_region
    _
  $region13: #{_mnn_loss_forward.1} parent=0 // pred_fallthru
    _
  // Predicated region
  $region14: #{_mnn_loss_forward.1} parent=0 // pred_check
    _
  $region15: #{_mnn_loss_forward.1} parent=0 // pred_check_branch
    %18 = sbr.rel (0) target = $region17
  $region16: #{_mnn_loss_forward.1} parent=0 // pred_region
    _
  $region17: #{_mnn_loss_forward.1} parent=0 // pred_fallthru
    _
  // Predicated region
  $region18: #{_mnn_loss_forward.1} parent=0 // pred_check
    _
  $region19: #{_mnn_loss_forward.1} parent=0 // pred_check_branch
    %20 = sbr.rel (0) target = $region21
  $region20: #{_mnn_loss_forward.1} parent=0 // pred_region
    _
  $region21: #{_mnn_loss_forward.1} parent=0 // pred_fallthru
    _
  // Predicated region
  $region22: #{_mnn_loss_forward.1} parent=0 // pred_check
    _
  $region23: #{_mnn_loss_forward.1} parent=0 // pred_check_branch
    %22 = sbr.rel (0) target = $region25
  $region24: #{_mnn_loss_forward.1} parent=0 // pred_region
    _
  $region25: #{_mnn_loss_forward.1} parent=0 // pred_fallthru
    _
  %v24 = vld [vmem:[%s1] sm:$0xff]
  %v25 = vld [vmem:[%s1 + $0x8] sm:$0xff]
  %v26 = vld [vmem:[%s1 + $0x10] sm:$0xff]
  %v27 = vld [vmem:[%s1 + $0x18] sm:$0xff]
  %v28 = vld [vmem:[%s1 + $0x20] sm:$0xff]
  %v29 = vld [vmem:[%s1 + $0x28] sm:$0xff]
  %v30 = vld [vmem:[%s1 + $0x30] sm:$0xff]
  %v31 = vld [vmem:[%s1 + $0x38] sm:$0xff]
  %v32 = vld [vmem:[%s0] sm:$0xff]
  %v33 = vld [vmem:[%s0 + $0x8] sm:$0xff]
  %vm34 = vcmp.ge.s32.totalorder %v32, 0
  %vm35 = vcmp.ge.s32.totalorder %v33, 0
  %v36 = vsel %vm34, 1, 0
  %v37 = vsel %vm35, 1, 0
  %v38 = vcvt.s32.f32 %v36
  %v39 = vcvt.s32.f32 %v37
  %v40 = vlaneseq
  %v41 = vand.u32 %v40, 127
  %42 = vset.pattern.permute.xlu0 0
  %43 = vperm.xlu0 %42, %v32
  %v44 = vpop.permute.xlu0 %43
  %45 = vset.pattern.permute.xlu0 0
  %46 = vperm.xlu0 %45, %v33
  %v47 = vpop.permute.xlu0 %46
  %vm48 = vcmp.eq.s32.totalorder %v41, %v44
  %vm49 = vcmp.eq.s32.totalorder %v41, %v47
  %v50 = vld [vmem:[%s2] sm:$0xf]
  %v51 = vld [vmem:[%s2 + $0x4] sm:$0xf]
  %v52 = vld [vmem:[%s2 + $0x8] sm:$0xf]
  %v53 = vld [vmem:[%s2 + $0xc] sm:$0xf]
  %v54 = vld [vmem:[%s2 + $0x10] sm:$0xf]
  %v55 = vld [vmem:[%s2 + $0x14] sm:$0xf]
  %v56 = vld [vmem:[%s2 + $0x18] sm:$0xf]
  %v57 = vld [vmem:[%s2 + $0x1c] sm:$0xf]
  %v58 = vld [vmem:[%s2 + $0x20] sm:$0xf]
  %v59 = vld [vmem:[%s2 + $0x24] sm:$0xf]
  %v60 = vld [vmem:[%s2 + $0x28] sm:$0xf]
  %v61 = vld [vmem:[%s2 + $0x2c] sm:$0xf]
  %v62 = vld [vmem:[%s2 + $0x30] sm:$0xf]
  %v63 = vld [vmem:[%s2 + $0x34] sm:$0xf]
  %v64 = vld [vmem:[%s2 + $0x38] sm:$0xf]
  %v65 = vld [vmem:[%s2 + $0x3c] sm:$0xf]
  %v66 = vld [vmem:[%s2 + $0x40] sm:$0xf]
  %v67 = vld [vmem:[%s2 + $0x44] sm:$0xf]
  %v68 = vld [vmem:[%s2 + $0x48] sm:$0xf]
  %v69 = vld [vmem:[%s2 + $0x4c] sm:$0xf]
  %v70 = vld [vmem:[%s2 + $0x50] sm:$0xf]
  %v71 = vld [vmem:[%s2 + $0x54] sm:$0xf]
  %v72 = vld [vmem:[%s2 + $0x58] sm:$0xf]
  %v73 = vld [vmem:[%s2 + $0x5c] sm:$0xf]
  %v74 = vld [vmem:[%s2 + $0x60] sm:$0xf]
  %v75 = vld [vmem:[%s2 + $0x64] sm:$0xf]
  %v76 = vld [vmem:[%s2 + $0x68] sm:$0xf]
  %v77 = vld [vmem:[%s2 + $0x6c] sm:$0xf]
  %v78 = vld [vmem:[%s2 + $0x70] sm:$0xf]
  %v79 = vld [vmem:[%s2 + $0x74] sm:$0xf]
  %v80 = vld [vmem:[%s2 + $0x78] sm:$0xf]
  %v81 = vld [vmem:[%s2 + $0x7c] sm:$0xf]
  %v82 = vld [vmem:[%s2 + $0x80] sm:$0xf]
  %v83 = vld [vmem:[%s2 + $0x84] sm:$0xf]
  %v84 = vld [vmem:[%s2 + $0x88] sm:$0xf]
  %v85 = vld [vmem:[%s2 + $0x8c] sm:$0xf]
  %v86 = vld [vmem:[%s2 + $0x90] sm:$0xf]
  %v87 = vld [vmem:[%s2 + $0x94] sm:$0xf]
  %v88 = vld [vmem:[%s2 + $0x98] sm:$0xf]
  %v89 = vld [vmem:[%s2 + $0x9c] sm:$0xf]
  %v90 = vld [vmem:[%s2 + $0xa0] sm:$0xf]
  %v91 = vld [vmem:[%s2 + $0xa4] sm:$0xf]
  %v92 = vld [vmem:[%s2 + $0xa8] sm:$0xf]
  %v93 = vld [vmem:[%s2 + $0xac] sm:$0xf]
  %v94 = vld [vmem:[%s2 + $0xb0] sm:$0xf]
  %v95 = vld [vmem:[%s2 + $0xb4] sm:$0xf]
  %v96 = vld [vmem:[%s2 + $0xb8] sm:$0xf]
  %v97 = vld [vmem:[%s2 + $0xbc] sm:$0xf]
  %v98 = vld [vmem:[%s2 + $0xc0] sm:$0xf]
  %v99 = vld [vmem:[%s2 + $0xc4] sm:$0xf]
  %v100 = vld [vmem:[%s2 + $0xc8] sm:$0xf]
  %v101 = vld [vmem:[%s2 + $0xcc] sm:$0xf]
  %v102 = vld [vmem:[%s2 + $0xd0] sm:$0xf]
  %v103 = vld [vmem:[%s2 + $0xd4] sm:$0xf]
  %v104 = vld [vmem:[%s2 + $0xd8] sm:$0xf]
  %v105 = vld [vmem:[%s2 + $0xdc] sm:$0xf]
  %v106 = vld [vmem:[%s2 + $0xe0] sm:$0xf]
  %v107 = vld [vmem:[%s2 + $0xe4] sm:$0xf]
  %v108 = vld [vmem:[%s2 + $0xe8] sm:$0xf]
  %v109 = vld [vmem:[%s2 + $0xec] sm:$0xf]
  %v110 = vld [vmem:[%s2 + $0xf0] sm:$0xf]
  %v111 = vld [vmem:[%s2 + $0xf4] sm:$0xf]
  %v112 = vld [vmem:[%s2 + $0xf8] sm:$0xf]
  %v113 = vld [vmem:[%s2 + $0xfc] sm:$0xf]
  %v114 = vld [vmem:[%s2 + $0x100] sm:$0xf]
  %v115 = vld [vmem:[%s2 + $0x104] sm:$0xf]
  %v116 = vld [vmem:[%s2 + $0x108] sm:$0xf]
  %v117 = vld [vmem:[%s2 + $0x10c] sm:$0xf]
  %v118 = vld [vmem:[%s2 + $0x110] sm:$0xf]
  %v119 = vld [vmem:[%s2 + $0x114] sm:$0xf]
  %v120 = vld [vmem:[%s2 + $0x118] sm:$0xf]
  %v121 = vld [vmem:[%s2 + $0x11c] sm:$0xf]
  %v122 = vld [vmem:[%s2 + $0x120] sm:$0xf]
  %v123 = vld [vmem:[%s2 + $0x124] sm:$0xf]
  %v124 = vld [vmem:[%s2 + $0x128] sm:$0xf]
  %v125 = vld [vmem:[%s2 + $0x12c] sm:$0xf]
  %v126 = vld [vmem:[%s2 + $0x130] sm:$0xf]
  %v127 = vld [vmem:[%s2 + $0x134] sm:$0xf]
  %v128 = vld [vmem:[%s2 + $0x138] sm:$0xf]
  %v129 = vld [vmem:[%s2 + $0x13c] sm:$0xf]
  %v130 = vld [vmem:[%s2 + $0x140] sm:$0xf]
  %v131 = vld [vmem:[%s2 + $0x144] sm:$0xf]
  %v132 = vld [vmem:[%s2 + $0x148] sm:$0xf]
  %v133 = vld [vmem:[%s2 + $0x14c] sm:$0xf]
  %v134 = vld [vmem:[%s2 + $0x150] sm:$0xf]
  %v135 = vld [vmem:[%s2 + $0x154] sm:$0xf]
  %v136 = vld [vmem:[%s2 + $0x158] sm:$0xf]
  %v137 = vld [vmem:[%s2 + $0x15c] sm:$0xf]
  %v138 = vld [vmem:[%s2 + $0x160] sm:$0xf]
  %v139 = vld [vmem:[%s2 + $0x164] sm:$0xf]
  %v140 = vld [vmem:[%s2 + $0x168] sm:$0xf]
  %v141 = vld [vmem:[%s2 + $0x16c] sm:$0xf]
  %v142 = vld [vmem:[%s2 + $0x170] sm:$0xf]
  %v143 = vld [vmem:[%s2 + $0x174] sm:$0xf]
  %v144 = vld [vmem:[%s2 + $0x178] sm:$0xf]
  %v145 = vld [vmem:[%s2 + $0x17c] sm:$0xf]
  %v146 = vld [vmem:[%s2 + $0x180] sm:$0xf]
  %v147 = vld [vmem:[%s2 + $0x184] sm:$0xf]
  %v148 = vld [vmem:[%s2 + $0x188] sm:$0xf]
  %v149 = vld [vmem:[%s2 + $0x18c] sm:$0xf]
  %v150 = vld [vmem:[%s2 + $0x190] sm:$0xf]
  %v151 = vld [vmem:[%s2 + $0x194] sm:$0xf]
  %v152 = vld [vmem:[%s2 + $0x198] sm:$0xf]
  %v153 = vld [vmem:[%s2 + $0x19c] sm:$0xf]
  %v154 = vld [vmem:[%s2 + $0x1a0] sm:$0xf]
  %v155 = vld [vmem:[%s2 + $0x1a4] sm:$0xf]
  %v156 = vld [vmem:[%s2 + $0x1a8] sm:$0xf]
  %v157 = vld [vmem:[%s2 + $0x1ac] sm:$0xf]
  %v158 = vld [vmem:[%s2 + $0x1b0] sm:$0xf]
  %v159 = vld [vmem:[%s2 + $0x1b4] sm:$0xf]
  %v160 = vld [vmem:[%s2 + $0x1b8] sm:$0xf]
  %v161 = vld [vmem:[%s2 + $0x1bc] sm:$0xf]
  %v162 = vld [vmem:[%s2 + $0x1c0] sm:$0xf]
  %v163 = vld [vmem:[%s2 + $0x1c4] sm:$0xf]
  %v164 = vld [vmem:[%s2 + $0x1c8] sm:$0xf]
  %v165 = vld [vmem:[%s2 + $0x1cc] sm:$0xf]
  %v166 = vld [vmem:[%s2 + $0x1d0] sm:$0xf]
  %v167 = vld [vmem:[%s2 + $0x1d4] sm:$0xf]
  %v168 = vld [vmem:[%s2 + $0x1d8] sm:$0xf]
  %v169 = vld [vmem:[%s2 + $0x1dc] sm:$0xf]
  %v170 = vld [vmem:[%s2 + $0x1e0] sm:$0xf]
  %v171 = vld [vmem:[%s2 + $0x1e4] sm:$0xf]
  %v172 = vld [vmem:[%s2 + $0x1e8] sm:$0xf]
  %v173 = vld [vmem:[%s2 + $0x1ec] sm:$0xf]
  %v174 = vld [vmem:[%s2 + $0x1f0] sm:$0xf]
  %v175 = vld [vmem:[%s2 + $0x1f4] sm:$0xf]
  %v176 = vld [vmem:[%s2 + $0x1f8] sm:$0xf]
  %v177 = vld [vmem:[%s2 + $0x1fc] sm:$0xf]
  %v178 = vld [vmem:[%s3] sm:$0x1]
  %v179 = vld [vmem:[%s4] sm:$0xf]
  %v180 = vld [vmem:[%s4 + $0x4] sm:$0xf]
  %v181 = vld [vmem:[%s4 + $0x8] sm:$0xf]
  %v182 = vld [vmem:[%s4 + $0xc] sm:$0xf]
  %v183 = vld [vmem:[%s4 + $0x10] sm:$0xf]
  %v184 = vld [vmem:[%s4 + $0x14] sm:$0xf]
  %v185 = vld [vmem:[%s4 + $0x18] sm:$0xf]
  %v186 = vld [vmem:[%s4 + $0x1c] sm:$0xf]
  %v187 = vld [vmem:[%s4 + $0x20] sm:$0xf]
  %v188 = vld [vmem:[%s4 + $0x24] sm:$0xf]
  %v189 = vld [vmem:[%s4 + $0x28] sm:$0xf]
  %v190 = vld [vmem:[%s4 + $0x2c] sm:$0xf]
  %v191 = vld [vmem:[%s4 + $0x30] sm:$0xf]
  %v192 = vld [vmem:[%s4 + $0x34] sm:$0xf]
  %v193 = vld [vmem:[%s4 + $0x38] sm:$0xf]
  %v194 = vld [vmem:[%s4 + $0x3c] sm:$0xf]
  %v195 = vld [vmem:[%s5] sm:$0x1]
  %v197 = vlaneseq
  %v198 = vshrl.u32 %v197, 7
  %v199 = vsub.s32 0, %v198
  %v200 = vrot.slane %v178, %v199
  %v210 = vunpack.c.l.b16 %v24
  %v211 = vunpack.c.h.b16 %v24
  %v212 = vunpack.c.l.b16 %v25
  %v213 = vunpack.c.h.b16 %v25
  %v214 = vunpack.c.l.b16 %v26
  %v215 = vunpack.c.h.b16 %v26
  %v216 = vunpack.c.l.b16 %v27
  %v217 = vunpack.c.h.b16 %v27
  %v218 = vunpack.c.l.b16 %v28
  %v219 = vunpack.c.h.b16 %v28
  %v220 = vunpack.c.l.b16 %v29
  %v221 = vunpack.c.h.b16 %v29
  %v222 = vunpack.c.l.b16 %v30
  %v223 = vunpack.c.h.b16 %v30
  %v224 = vunpack.c.l.b16 %v31
  %v225 = vunpack.c.h.b16 %v31
  %v226 = vpack.c.b16 %v218, %v210
  %v227 = vpack.c.b16 %v219, %v211
  %v228 = vpack.c.b16 %v220, %v212
  %v229 = vpack.c.b16 %v221, %v213
  %v230 = vpack.c.b16 %v222, %v214
  %v231 = vpack.c.b16 %v223, %v215
  %v232 = vpack.c.b16 %v224, %v216
  %v233 = vpack.c.b16 %v225, %v217
  %v370 = vunpack.c.l.b16 %v50
  %v371 = vunpack.c.l.b16 %v51
  %v372 = vunpack.c.l.b16 %v52
  %v373 = vunpack.c.l.b16 %v53
  %v374 = vunpack.c.l.b16 %v54
  %v375 = vunpack.c.l.b16 %v55
  %v376 = vunpack.c.l.b16 %v56
  %v377 = vunpack.c.l.b16 %v57
  %v378 = vunpack.c.l.b16 %v58
  %v379 = vunpack.c.l.b16 %v59
  %v380 = vunpack.c.l.b16 %v60
  %v381 = vunpack.c.l.b16 %v61
  %v382 = vunpack.c.l.b16 %v62
  %v383 = vunpack.c.l.b16 %v63
  %v384 = vunpack.c.l.b16 %v64
  %v385 = vunpack.c.l.b16 %v65
  %v386 = vunpack.c.l.b16 %v66
  %v387 = vunpack.c.l.b16 %v67
  %v388 = vunpack.c.l.b16 %v68
  %v389 = vunpack.c.l.b16 %v69
  %v390 = vunpack.c.l.b16 %v70
  %v391 = vunpack.c.l.b16 %v71
  %v392 = vunpack.c.l.b16 %v72
  %v393 = vunpack.c.l.b16 %v73
  %v394 = vunpack.c.l.b16 %v74
  %v395 = vunpack.c.l.b16 %v75
  %v396 = vunpack.c.l.b16 %v76
  %v397 = vunpack.c.l.b16 %v77
  %v398 = vunpack.c.l.b16 %v78
  %v399 = vunpack.c.l.b16 %v79
  %v400 = vunpack.c.l.b16 %v80
  %v401 = vunpack.c.l.b16 %v81
  %v402 = vunpack.c.l.b16 %v82
  %v403 = vunpack.c.l.b16 %v83
  %v404 = vunpack.c.l.b16 %v84
  %v405 = vunpack.c.l.b16 %v85
  %v406 = vunpack.c.l.b16 %v86
  %v407 = vunpack.c.l.b16 %v87
  %v408 = vunpack.c.l.b16 %v88
  %v409 = vunpack.c.l.b16 %v89
  %v410 = vunpack.c.l.b16 %v90
  %v411 = vunpack.c.l.b16 %v91
  %v412 = vunpack.c.l.b16 %v92
  %v413 = vunpack.c.l.b16 %v93
  %v414 = vunpack.c.l.b16 %v94
  %v415 = vunpack.c.l.b16 %v95
  %v416 = vunpack.c.l.b16 %v96
  %v417 = vunpack.c.l.b16 %v97
  %v418 = vunpack.c.l.b16 %v98
  %v419 = vunpack.c.l.b16 %v99
  %v420 = vunpack.c.l.b16 %v100
  %v421 = vunpack.c.l.b16 %v101
  %v422 = vunpack.c.l.b16 %v102
  %v423 = vunpack.c.l.b16 %v103
  %v424 = vunpack.c.l.b16 %v104
  %v425 = vunpack.c.l.b16 %v105
  %v426 = vunpack.c.l.b16 %v106
  %v427 = vunpack.c.l.b16 %v107
  %v428 = vunpack.c.l.b16 %v108
  %v429 = vunpack.c.l.b16 %v109
  %v430 = vunpack.c.l.b16 %v110
  %v431 = vunpack.c.l.b16 %v111
  %v432 = vunpack.c.l.b16 %v112
  %v433 = vunpack.c.l.b16 %v113
  %v434 = vunpack.c.l.b16 %v114
  %v435 = vunpack.c.l.b16 %v115
  %v436 = vunpack.c.l.b16 %v116
  %v437 = vunpack.c.l.b16 %v117
  %v438 = vunpack.c.l.b16 %v118
  %v439 = vunpack.c.l.b16 %v119
  %v440 = vunpack.c.l.b16 %v120
  %v441 = vunpack.c.l.b16 %v121
  %v442 = vunpack.c.l.b16 %v122
  %v443 = vunpack.c.l.b16 %v123
  %v444 = vunpack.c.l.b16 %v124
  %v445 = vunpack.c.l.b16 %v125
  %v446 = vunpack.c.l.b16 %v126
  %v447 = vunpack.c.l.b16 %v127
  %v448 = vunpack.c.l.b16 %v128
  %v449 = vunpack.c.l.b16 %v129
  %v450 = vunpack.c.l.b16 %v130
  %v451 = vunpack.c.l.b16 %v131
  %v452 = vunpack.c.l.b16 %v132
  %v453 = vunpack.c.l.b16 %v133
  %v454 = vunpack.c.l.b16 %v134
  %v455 = vunpack.c.l.b16 %v135
  %v456 = vunpack.c.l.b16 %v136
  %v457 = vunpack.c.l.b16 %v137
  %v458 = vunpack.c.l.b16 %v138
  %v459 = vunpack.c.l.b16 %v139
  %v460 = vunpack.c.l.b16 %v140
  %v461 = vunpack.c.l.b16 %v141
  %v462 = vunpack.c.l.b16 %v142
  %v463 = vunpack.c.l.b16 %v143
  %v464 = vunpack.c.l.b16 %v144
  %v465 = vunpack.c.l.b16 %v145
  %v466 = vunpack.c.l.b16 %v146
  %v467 = vunpack.c.l.b16 %v147
  %v468 = vunpack.c.l.b16 %v148
  %v469 = vunpack.c.l.b16 %v149
  %v470 = vunpack.c.l.b16 %v150
  %v471 = vunpack.c.l.b16 %v151
  %v472 = vunpack.c.l.b16 %v152
  %v473 = vunpack.c.l.b16 %v153
  %v474 = vunpack.c.l.b16 %v154
  %v475 = vunpack.c.l.b16 %v155
  %v476 = vunpack.c.l.b16 %v156
  %v477 = vunpack.c.l.b16 %v157
  %v478 = vunpack.c.l.b16 %v158
  %v479 = vunpack.c.l.b16 %v159
  %v480 = vunpack.c.l.b16 %v160
  %v481 = vunpack.c.l.b16 %v161
  %v482 = vunpack.c.l.b16 %v162
  %v483 = vunpack.c.l.b16 %v163
  %v484 = vunpack.c.l.b16 %v164
  %v485 = vunpack.c.l.b16 %v165
  %v486 = vunpack.c.l.b16 %v166
  %v487 = vunpack.c.l.b16 %v167
  %v488 = vunpack.c.l.b16 %v168
  %v489 = vunpack.c.l.b16 %v169
  %v490 = vunpack.c.l.b16 %v170
  %v491 = vunpack.c.l.b16 %v171
  %v492 = vunpack.c.l.b16 %v172
  %v493 = vunpack.c.l.b16 %v173
  %v494 = vunpack.c.l.b16 %v174
  %v495 = vunpack.c.l.b16 %v175
  %v496 = vunpack.c.l.b16 %v176
  %v497 = vunpack.c.l.b16 %v177
  %v498 = vpack.c.b16 %v371, %v370
  %v499 = vpack.c.b16 %v373, %v372
  %v500 = vpack.c.b16 %v375, %v374
  %v501 = vpack.c.b16 %v377, %v376
  %v502 = vpack.c.b16 %v379, %v378
  %v503 = vpack.c.b16 %v381, %v380
  %v504 = vpack.c.b16 %v383, %v382
  %v505 = vpack.c.b16 %v385, %v384
  %v506 = vpack.c.b16 %v387, %v386
  %v507 = vpack.c.b16 %v389, %v388
  %v508 = vpack.c.b16 %v391, %v390
  %v509 = vpack.c.b16 %v393, %v392
  %v510 = vpack.c.b16 %v395, %v394
  %v511 = vpack.c.b16 %v397, %v396
  %v512 = vpack.c.b16 %v399, %v398
  %v513 = vpack.c.b16 %v401, %v400
  %v514 = vpack.c.b16 %v403, %v402
  %v515 = vpack.c.b16 %v405, %v404
  %v516 = vpack.c.b16 %v407, %v406
  %v517 = vpack.c.b16 %v409, %v408
  %v518 = vpack.c.b16 %v411, %v410
  %v519 = vpack.c.b16 %v413, %v412
  %v520 = vpack.c.b16 %v415, %v414
  %v521 = vpack.c.b16 %v417, %v416
  %v522 = vpack.c.b16 %v419, %v418
  %v523 = vpack.c.b16 %v421, %v420
  %v524 = vpack.c.b16 %v423, %v422
  %v525 = vpack.c.b16 %v425, %v424
  %v526 = vpack.c.b16 %v427, %v426
  %v527 = vpack.c.b16 %v429, %v428
  %v528 = vpack.c.b16 %v431, %v430
  %v529 = vpack.c.b16 %v433, %v432
  %v530 = vpack.c.b16 %v435, %v434
  %v531 = vpack.c.b16 %v437, %v436
  %v532 = vpack.c.b16 %v439, %v438
  %v533 = vpack.c.b16 %v441, %v440
  %v534 = vpack.c.b16 %v443, %v442
  %v535 = vpack.c.b16 %v445, %v444
  %v536 = vpack.c.b16 %v447, %v446
  %v537 = vpack.c.b16 %v449, %v448
  %v538 = vpack.c.b16 %v451, %v450
  %v539 = vpack.c.b16 %v453, %v452
  %v540 = vpack.c.b16 %v455, %v454
  %v541 = vpack.c.b16 %v457, %v456
  %v542 = vpack.c.b16 %v459, %v458
  %v543 = vpack.c.b16 %v461, %v460
  %v544 = vpack.c.b16 %v463, %v462
  %v545 = vpack.c.b16 %v465, %v464
  %v546 = vpack.c.b16 %v467, %v466
  %v547 = vpack.c.b16 %v469, %v468
  %v548 = vpack.c.b16 %v471, %v470
  %v549 = vpack.c.b16 %v473, %v472
  %v550 = vpack.c.b16 %v475, %v474
  %v551 = vpack.c.b16 %v477, %v476
  %v552 = vpack.c.b16 %v479, %v478
  %v553 = vpack.c.b16 %v481, %v480
  %v554 = vpack.c.b16 %v483, %v482
  %v555 = vpack.c.b16 %v485, %v484
  %v556 = vpack.c.b16 %v487, %v486
  %v557 = vpack.c.b16 %v489, %v488
  %v558 = vpack.c.b16 %v491, %v490
  %v559 = vpack.c.b16 %v493, %v492
  %v560 = vpack.c.b16 %v495, %v494
  %v561 = vpack.c.b16 %v497, %v496
  %626 = vmatprep.subr.bf16.mxu0 0
  %627 = vmatpush1.bf16.msra.mxu0 %v505
  %628 = vmatprep.subr.bf16.mxu0 0
  %629 = vmatpush1.bf16.msra.mxu0 %v504
  %630 = vmatprep.subr.bf16.mxu0 0
  %631 = vmatpush1.bf16.msra.mxu0 %v503
  %632 = vmatprep.subr.bf16.mxu0 0
  %633 = vmatpush1.bf16.msra.mxu0 %v502
  %634 = vmatprep.subr.bf16.mxu0 0
  %635 = vmatpush1.bf16.msra.mxu0 %v501
  %636 = vmatprep.subr.bf16.mxu0 0
  %637 = vmatpush1.bf16.msra.mxu0 %v500
  %638 = vmatprep.subr.bf16.mxu0 0
  %639 = vmatpush1.bf16.msra.mxu0 %v499
  %640 = vmatprep.subr.bf16.mxu0 0
  %641 = vmatpush1.bf16.msra.mxu0 %v498
  %642 = vmatprep.subr.bf16.mxu0 0
  %643 = vmatpush2.bf16.msra.mxu0 %v513
  %644 = vmatprep.subr.bf16.mxu0 0
  %645 = vmatpush2.bf16.msra.mxu0 %v512
  %646 = vmatprep.subr.bf16.mxu0 0
  %647 = vmatpush2.bf16.msra.mxu0 %v511
  %648 = vmatprep.subr.bf16.mxu0 0
  %649 = vmatpush2.bf16.msra.mxu0 %v510
  %650 = vmatprep.subr.bf16.mxu0 0
  %651 = vmatpush2.bf16.msra.mxu0 %v509
  %652 = vmatprep.subr.bf16.mxu0 0
  %653 = vmatpush2.bf16.msra.mxu0 %v508
  %654 = vmatprep.subr.bf16.mxu0 0
  %655 = vmatpush2.bf16.msra.mxu0 %v507
  %656 = vmatprep.subr.bf16.mxu0 0
  %657 = vmatpush2.bf16.msra.mxu0 %v506
  %658 = vmatprep.mubr.bf16.mxu0 %v227
  %659 = vmatmul.mubr.bf16.gmra.mxu0 %v226
  %v660 = vpop.f32.mrf.mxu0
  %v661 = vadd.f32 %v200, %v660
  %v662 = vpop.f32.mrf.mxu0
  %v663 = vpop.f32.mrf.mxu0
  %v664 = vadd.f32 %v200, %v663
  %v665 = vpop.f32.mrf.mxu0
  %666 = vdwg.mxu0
  %667 = vmatprep.subr.bf16.mxu0 0
  %668 = vmatpush1.bf16.msra.mxu0 %v521
  %669 = vmatprep.subr.bf16.mxu0 0
  %670 = vmatpush1.bf16.msra.mxu0 %v520
  %671 = vmatprep.subr.bf16.mxu0 0
  %672 = vmatpush1.bf16.msra.mxu0 %v519
  %673 = vmatprep.subr.bf16.mxu0 0
  %674 = vmatpush1.bf16.msra.mxu0 %v518
  %675 = vmatprep.subr.bf16.mxu0 0
  %676 = vmatpush1.bf16.msra.mxu0 %v517
  %677 = vmatprep.subr.bf16.mxu0 0
  %678 = vmatpush1.bf16.msra.mxu0 %v516
  %679 = vmatprep.subr.bf16.mxu0 0
  %680 = vmatpush1.bf16.msra.mxu0 %v515
  %681 = vmatprep.subr.bf16.mxu0 0
  %682 = vmatpush1.bf16.msra.mxu0 %v514
  %683 = vmatprep.subr.bf16.mxu0 0
  %684 = vmatpush2.bf16.msra.mxu0 %v529
  %685 = vmatprep.subr.bf16.mxu0 0
  %686 = vmatpush2.bf16.msra.mxu0 %v528
  %687 = vmatprep.subr.bf16.mxu0 0
  %688 = vmatpush2.bf16.msra.mxu0 %v527
  %689 = vmatprep.subr.bf16.mxu0 0
  %690 = vmatpush2.bf16.msra.mxu0 %v526
  %691 = vmatprep.subr.bf16.mxu0 0
  %692 = vmatpush2.bf16.msra.mxu0 %v525
  %693 = vmatprep.subr.bf16.mxu0 0
  %694 = vmatpush2.bf16.msra.mxu0 %v524
  %695 = vmatprep.subr.bf16.mxu0 0
  %696 = vmatpush2.bf16.msra.mxu0 %v523
  %697 = vmatprep.subr.bf16.mxu0 0
  %698 = vmatpush2.bf16.msra.mxu0 %v522
  %699 = vmatprep.mubr.bf16.mxu0 %v229
  %700 = vmatmul.mubr.bf16.gmra.mxu0 %v228
  %v701 = vpop.f32.mrf.mxu0
  %v702 = vadd.f32 %v661, %v701
  %v703 = vpop.f32.mrf.mxu0
  %v704 = vpop.f32.mrf.mxu0
  %v705 = vadd.f32 %v664, %v704
  %v706 = vpop.f32.mrf.mxu0
  %707 = vdwg.mxu0
  %708 = vmatprep.subr.bf16.mxu0 0
  %709 = vmatpush1.bf16.msra.mxu0 %v537
  %710 = vmatprep.subr.bf16.mxu0 0
  %711 = vmatpush1.bf16.msra.mxu0 %v536
  %712 = vmatprep.subr.bf16.mxu0 0
  %713 = vmatpush1.bf16.msra.mxu0 %v535
  %714 = vmatprep.subr.bf16.mxu0 0
  %715 = vmatpush1.bf16.msra.mxu0 %v534
  %716 = vmatprep.subr.bf16.mxu0 0
  %717 = vmatpush1.bf16.msra.mxu0 %v533
  %718 = vmatprep.subr.bf16.mxu0 0
  %719 = vmatpush1.bf16.msra.mxu0 %v532
  %720 = vmatprep.subr.bf16.mxu0 0
  %721 = vmatpush1.bf16.msra.mxu0 %v531
  %722 = vmatprep.subr.bf16.mxu0 0
  %723 = vmatpush1.bf16.msra.mxu0 %v530
  %724 = vmatprep.subr.bf16.mxu0 0
  %725 = vmatpush2.bf16.msra.mxu0 %v545
  %726 = vmatprep.subr.bf16.mxu0 0
  %727 = vmatpush2.bf16.msra.mxu0 %v544
  %728 = vmatprep.subr.bf16.mxu0 0
  %729 = vmatpush2.bf16.msra.mxu0 %v543
  %730 = vmatprep.subr.bf16.mxu0 0
  %731 = vmatpush2.bf16.msra.mxu0 %v542
  %732 = vmatprep.subr.bf16.mxu0 0
  %733 = vmatpush2.bf16.msra.mxu0 %v541
  %734 = vmatprep.subr.bf16.mxu0 0
  %735 = vmatpush2.bf16.msra.mxu0 %v540
  %736 = vmatprep.subr.bf16.mxu0 0
  %737 = vmatpush2.bf16.msra.mxu0 %v539
  %738 = vmatprep.subr.bf16.mxu0 0
  %739 = vmatpush2.bf16.msra.mxu0 %v538
  %740 = vmatprep.mubr.bf16.mxu0 %v231
  %741 = vmatmul.mubr.bf16.gmra.mxu0 %v230
  %v742 = vpop.f32.mrf.mxu0
  %v743 = vadd.f32 %v702, %v742
  %v744 = vpop.f32.mrf.mxu0
  %v745 = vpop.f32.mrf.mxu0
  %v746 = vadd.f32 %v705, %v745
  %v747 = vpop.f32.mrf.mxu0
  %748 = vdwg.mxu0
  %749 = vmatprep.subr.bf16.mxu0 0
  %750 = vmatpush1.bf16.msra.mxu0 %v553
  %751 = vmatprep.subr.bf16.mxu0 0
  %752 = vmatpush1.bf16.msra.mxu0 %v552
  %753 = vmatprep.subr.bf16.mxu0 0
  %754 = vmatpush1.bf16.msra.mxu0 %v551
  %755 = vmatprep.subr.bf16.mxu0 0
  %756 = vmatpush1.bf16.msra.mxu0 %v550
  %757 = vmatprep.subr.bf16.mxu0 0
  %758 = vmatpush1.bf16.msra.mxu0 %v549
  %759 = vmatprep.subr.bf16.mxu0 0
  %760 = vmatpush1.bf16.msra.mxu0 %v548
  %761 = vmatprep.subr.bf16.mxu0 0
  %762 = vmatpush1.bf16.msra.mxu0 %v547
  %763 = vmatprep.subr.bf16.mxu0 0
  %764 = vmatpush1.bf16.msra.mxu0 %v546
  %765 = vmatprep.subr.bf16.mxu0 0
  %766 = vmatpush2.bf16.msra.mxu0 %v561
  %767 = vmatprep.subr.bf16.mxu0 0
  %768 = vmatpush2.bf16.msra.mxu0 %v560
  %769 = vmatprep.subr.bf16.mxu0 0
  %770 = vmatpush2.bf16.msra.mxu0 %v559
  %771 = vmatprep.subr.bf16.mxu0 0
  %772 = vmatpush2.bf16.msra.mxu0 %v558
  %773 = vmatprep.subr.bf16.mxu0 0
  %774 = vmatpush2.bf16.msra.mxu0 %v557
  %775 = vmatprep.subr.bf16.mxu0 0
  %776 = vmatpush2.bf16.msra.mxu0 %v556
  %777 = vmatprep.subr.bf16.mxu0 0
  %778 = vmatpush2.bf16.msra.mxu0 %v555
  %779 = vmatprep.subr.bf16.mxu0 0
  %780 = vmatpush2.bf16.msra.mxu0 %v554
  %781 = vmatprep.mubr.bf16.mxu0 %v233
  %782 = vmatmul.mubr.bf16.gmra.mxu0 %v232
  %v783 = vpop.f32.mrf.mxu0
  %v784 = vadd.f32 %v743, %v783
  %v785 = vpop.f32.mrf.mxu0
  %v786 = vpop.f32.mrf.mxu0
  %v787 = vadd.f32 %v746, %v786
  %v788 = vpop.f32.mrf.mxu0
  %789 = vdwg.mxu0
  %v790 = vmax.f32 %v784, 0.0
  %v791 = vmax.f32 %v787, 0.0
  %v792 = vpack.c.bf16 %v791, %v790
  %v794 = vlaneseq
  %v795 = vshrl.u32 %v794, 7
  %v796 = vsub.s32 0, %v795
  %v797 = vrot.slane %v195, %v796
  %v815 = vunpack.c.l.b16 %v179
  %v816 = vunpack.c.l.b16 %v180
  %v817 = vunpack.c.l.b16 %v181
  %v818 = vunpack.c.l.b16 %v182
  %v819 = vunpack.c.l.b16 %v183
  %v820 = vunpack.c.l.b16 %v184
  %v821 = vunpack.c.l.b16 %v185
  %v822 = vunpack.c.l.b16 %v186
  %v823 = vunpack.c.l.b16 %v187
  %v824 = vunpack.c.l.b16 %v188
  %v825 = vunpack.c.l.b16 %v189
  %v826 = vunpack.c.l.b16 %v190
  %v827 = vunpack.c.l.b16 %v191
  %v828 = vunpack.c.l.b16 %v192
  %v829 = vunpack.c.l.b16 %v193
  %v830 = vunpack.c.l.b16 %v194
  %v831 = vpack.c.b16 %v816, %v815
  %v832 = vpack.c.b16 %v818, %v817
  %v833 = vpack.c.b16 %v820, %v819
  %v834 = vpack.c.b16 %v822, %v821
  %v835 = vpack.c.b16 %v824, %v823
  %v836 = vpack.c.b16 %v826, %v825
  %v837 = vpack.c.b16 %v828, %v827
  %v838 = vpack.c.b16 %v830, %v829
  %847 = vmatprep.subr.bf16.mxu0 0
  %848 = vmatpush1.bf16.msra.mxu0 %v838
  %849 = vmatprep.subr.bf16.mxu0 0
  %850 = vmatpush1.bf16.msra.mxu0 %v837
  %851 = vmatprep.subr.bf16.mxu0 0
  %852 = vmatpush1.bf16.msra.mxu0 %v836
  %853 = vmatprep.subr.bf16.mxu0 0
  %854 = vmatpush1.bf16.msra.mxu0 %v835
  %855 = vmatprep.subr.bf16.mxu0 0
  %856 = vmatpush1.bf16.msra.mxu0 %v834
  %857 = vmatprep.subr.bf16.mxu0 0
  %858 = vmatpush1.bf16.msra.mxu0 %v833
  %859 = vmatprep.subr.bf16.mxu0 0
  %860 = vmatpush1.bf16.msra.mxu0 %v832
  %861 = vmatprep.subr.bf16.mxu0 0
  %862 = vmatpush1.bf16.msra.mxu0 %v831
  %863 = vmatprep.subr.bf16.mxu0 0
  %864 = vmatpush2.bf16.msra.mxu0 0
  %865 = vmatprep.subr.bf16.mxu0 0
  %866 = vmatpush2.bf16.msra.mxu0 0
  %867 = vmatprep.subr.bf16.mxu0 0
  %868 = vmatpush2.bf16.msra.mxu0 0
  %869 = vmatprep.subr.bf16.mxu0 0
  %870 = vmatpush2.bf16.msra.mxu0 0
  %871 = vmatprep.subr.bf16.mxu0 0
  %872 = vmatpush2.bf16.msra.mxu0 0
  %873 = vmatprep.subr.bf16.mxu0 0
  %874 = vmatpush2.bf16.msra.mxu0 0
  %875 = vmatprep.subr.bf16.mxu0 0
  %876 = vmatpush2.bf16.msra.mxu0 0
  %877 = vmatprep.subr.bf16.mxu0 0
  %878 = vmatpush2.bf16.msra.mxu0 0
  %879 = vmatprep.mubr.bf16.mxu0 0
  %880 = vmatmul.mubr.bf16.gmra.mxu0 %v792
  %v881 = vpop.f32.mrf.mxu0
  %v882 = vadd.f32 %v797, %v881
  %v883 = vpop.f32.mrf.mxu0
  %v884 = vpop.f32.mrf.mxu0
  %v885 = vadd.f32 %v797, %v884
  %v886 = vpop.f32.mrf.mxu0
  %887 = vdwg.mxu0
  %888 = vmax.xlane.f32.xlu0 %v882
  %v889 = vpop.xlane.xlu0 %888
  %890 = vmax.xlane.f32.xlu0 %v885
  %v891 = vpop.xlane.xlu0 %890
  %v892 = vsub.f32 %v882, %v889
  %v893 = vsub.f32 %v885, %v891
  %v894 = vmul.f32 %v892, 1.442695
  %v895 = vpow.pop %v894
  %v896 = vmul.f32 %v893, 1.442695
  %v897 = vpow.pop %v896
  %898 = vadd.xlane.f32.xlu0 %v895
  %v899 = vpop.xlane.xlu0 %898
  %900 = vadd.xlane.f32.xlu0 %v897
  %v901 = vpop.xlane.xlu0 %900
  %v902 = vlog2.pop %v899
  %v903 = vmul.f32 %v902, 0.6931472
  %v904 = vlog2.pop %v901
  %v905 = vmul.f32 %v904, 0.6931472
  %v906 = vadd.f32 %v889, %v903
  %v907 = vadd.f32 %v891, %v905
  %v908 = vsel %vm48, %v882, 0.0
  %v909 = vsel %vm49, %v885, 0.0
  %910 = vadd.xlane.f32.xlu0 %v908
  %v911 = vpop.xlane.xlu0 %910
  %912 = vadd.xlane.f32.xlu0 %v909
  %v913 = vpop.xlane.xlu0 %912
  %v914 = vsub.f32 %v906, %v911
  %v915 = vsub.f32 %v907, %v913
  %v916 = vmul.f32 %v914, %v38
  %v917 = vmul.f32 %v915, %v39
  %vm918 = vcmask 7168
  %v919 = vsel %vm918, %v916, 0.0
  %v920 = vsel %vm918, %v917, 0.0
  %v921 = vadd.f32 %v919, %v920
  %922 = vadd.xlane.f32.xlu0 %v921
  %v923 = vpop.xlane.xlu0 %922
  %v924 = vrot.slane %v923, 4
  %v925 = vadd.f32 %v923, %v924
  %v926 = vrot.slane %v925, 2
  %v927 = vadd.f32 %v925, %v926
  %v928 = vrot.slane %v927, 1
  %v929 = vadd.f32 %v927, %v928
  %s930 = vtos %v929
  %s931 = smul.f32 %s930, 0.5
  %vm932 = vcmp.eq.s32.totalorder %v41, 0
  %v933 = vstv %s931
  %v934 = vsel %vm932, %v933, 0.0
  %v935 = vadd.f32 %v934, 0.0
  %936 = vst [vmem:[%s6] sm:$0xff] %v935
  // Predicated region
  $region26: #{_mnn_loss_forward.1} parent=0 // pred_check
    _
  $region27: #{_mnn_loss_forward.1} parent=0 // pred_check_branch
    %938 = sbr.rel (0) target = $region29
  $region28: #{_mnn_loss_forward.1} parent=0 // pred_region
    _
  $region29: #{_mnn_loss_forward.1} parent=0 // pred_fallthru
    _
  // Predicated region
  $region30: #{_mnn_loss_forward.1} parent=0 // pred_check
    _
  $region31: #{_mnn_loss_forward.1} parent=0 // pred_check_branch
    %940 = sbr.rel (0) target = $region33
  $region32: #{_mnn_loss_forward.1} parent=0 // pred_region
    _
  $region33: #{_mnn_loss_forward.1} parent=0 // pred_fallthru
    _

</llo_original>
